<compile_context>
chip_gen: v7x
topology: tpu7x:2x2x1
jax: 0.10.0
libtpu: 0.0.40
codegen_flags: <defaults>
</compile_context>

<pallas_src>
import jax
import jax.numpy as jnp
from jax.experimental import pallas as pl
from jax.experimental.pallas import tpu as pltpu

N = 128                    # points per sample (lane axis)
K = 8                      # kNN neighbors (self included -- see TODO above)
C_PE = 128                 # PositionEmbedding(3, 128) output channels
C_LE = 64                  # DGCNN edge-conv output channels
C_OUT = C_PE + C_LE        # 192
C_ALL = C_PE + 2 * C_LE    # 256: [pe | edge-center | edge-neighbor] pre-activations
CIN = 5                    # logical input channels: [x, y, z, 1, jaw]
CPAD = 8                   # padded contraction dim (tile-friendly)
MAX_BB = 32                # max samples per grid step
EXACT_TOPK_TIEBREAK = False  # True -> lax.top_k-style lowest-index tie-break (costs ~30-40%
                             # of the kNN loop; only needed if exact duplicate points occur)


# ---------------------------------------------------------------------------
# Fused kernel: per sample -> pdist, kNN, PE, EdgeConv, writeback (all in VMEM)
# ---------------------------------------------------------------------------
def _fused_kernel(x_ref, xq_ref, xd_ref, w_ref, out_ref):
    """x_ref:(bb,CPAD,N) xq_ref:(bb,N,CPAD) xd_ref:(bb,CPAD,N) w_ref:(C_ALL,CPAD) out:(bb,C_OUT,N)."""
    w = w_ref[...]                                                   # (C_ALL, CPAD)
    bb = x_ref.shape[0]
    if EXACT_TOPK_TIEBREAK:
        col_idx = jax.lax.broadcasted_iota(jnp.int32, (N, N), 1)    # hoisted out of all loops

    def per_sample(bi, carry):
        xb = x_ref[bi]                                               # (CPAD, N) = [x,y,z,1,jaw,0..]

        # One MXU push for all pointwise linear work (PE + edge-center + edge-neighbor;
        # biases come from the ones row, the jaw scalar from the jaw row).
        pre = jnp.dot(w, xb, preferred_element_type=jnp.float32)     # (C_ALL, N)

        # Store PE immediately: frees its 16 vregs before the kNN loop (perf feedback #1).
        out_ref[bi, pl.ds(0, C_PE), :] = jnp.maximum(pre[0:C_PE, :], 0.0)
        center = pre[C_PE:C_PE + C_LE, :]                            # (C_LE, N)
        nbr = pre[C_PE + C_LE:C_ALL, :]                              # (C_LE, N)

        # Pairwise "distances" up to a per-row constant:
        #   dwork[i,j] = [x_i,1,0..] . [-2*x_j ; |x_j|^2 ; 0..] = |x_j|^2 - 2 x_i.x_j
        # (-2 scaling and |x_j|^2 row folded wrapper-side; ones/jaw rows excluded), so the
        # row-wise kNN ordering equals that of the true squared distance.
        dwork0 = jnp.dot(xq_ref[bi], xd_ref[bi],
                         preferred_element_type=jnp.float32)         # (N, N)

        # kNN + neighbor-feature max, fused: K passes of row-min -> one-hot selection ->
        # MXU "gather by matmul" of neighbor features -> running max.  fori_loop bounds
        # the live ranges of the per-pass temporaries (perf feedback #8).
        def knn_pass(_, state):
            dwork, m = state
            rowmin = jnp.min(dwork, axis=1, keepdims=True)           # (N, 1)  XLU reduce
            if EXACT_TOPK_TIEBREAK:
                cand = jnp.where(dwork == rowmin, col_idx, N)
                minidx = jnp.min(cand, axis=1, keepdims=True)
                sel = col_idx == minidx                              # exactly one-hot rows
            else:
                # one-hot provided there are no exact distance ties (measure-zero for real
                # float coords); set EXACT_TOPK_TIEBREAK=True if duplicate points can occur.
                sel = dwork == rowmin
            nbr_k = jax.lax.dot_general(
                nbr, sel.astype(jnp.float32), (((1,), (1,)), ((), ())),
                preferred_element_type=jnp.float32)                  # (C_LE, N): nbr[:, j_k(i)]
            m = jnp.maximum(m, nbr_k)
            dwork = jnp.where(sel, 3.0e38, dwork)                    # mask selected neighbor(s)
            return dwork, m

        m0 = jnp.full((C_LE, N), -jnp.inf, jnp.float32)
        _, m = jax.lax.fori_loop(0, K, knn_pass, (dwork0, m0))

        # max_k relu(center + nbr_k) == relu(center + max_k nbr_k)   (ReLU monotone)
        out_ref[bi, pl.ds(C_PE, C_LE), :] = jnp.maximum(center + m, 0.0)
        return carry

    jax.lax.fori_loop(0, bb, per_sample, 0)


def _batch_block(b):
    """Largest divisor of b that is <= MAX_BB while keeping grid length >= 2 when b >= 2
    (so the 'parallel' batch axis shards across both v7x TensorCores)."""
    cap = min(b, MAX_BB)
    if b >= 2:
        cap = max(1, min(cap, b // 2))
    for bb in range(cap, 0, -1):
        if b % bb == 0:
            return bb
    return 1


# ---------------------------------------------------------------------------
# Wrapper: FeatureExtractor.forward(x, jaw)
# ---------------------------------------------------------------------------
def feature_extractor(x, jaw, params, channels_last=True):
    """x: (B, 3, N) float32 (PyTorch Conv1d layout); jaw: (B,).
    Returns (B, N, 192) if channels_last else (B, 192, N) (kernel-native, no transpose)."""
    B = x.shape[0]
    x = x.astype(jnp.float32)
    jaw = jaw.astype(jnp.float32)
    wpe, bpe, wc, wn, wj, bed = params

    # Augmented weights: columns = [pe | edge-center | edge-neighbor],
    # rows = [x, y, z, bias(ones row), jaw, pad...].  Uses xr@wc+(xk-xr)@wn == x_i@(wc-wn)+x_k@wn.
    w_coord = jnp.concatenate([wpe, wc - wn, wn], axis=1)                    # (3, C_ALL)
    w_bias = jnp.concatenate(
        [bpe, bed, jnp.zeros((1, C_LE), jnp.float32)], axis=1)               # (1, C_ALL)
    w_jawr = jnp.concatenate(
        [jnp.zeros((1, C_PE), jnp.float32), wj,
         jnp.zeros((1, C_LE), jnp.float32)], axis=1)                         # (1, C_ALL)
    w_pad = jnp.zeros((CPAD - CIN, C_ALL), jnp.float32)
    w_aug_t = jnp.concatenate([w_coord, w_bias, w_jawr, w_pad], axis=0).T    # (C_ALL, CPAD)

    # Augmented, channels-first points: [x, y, z, 1, jaw, 0, 0, 0] per lane.
    ones_row = jnp.ones((B, 1, N), jnp.float32)
    jaw_row = jnp.broadcast_to(jaw.reshape(B, 1, 1), (B, 1, N))
    zpad3 = jnp.zeros((B, CPAD - CIN, N), jnp.float32)
    x_aug = jnp.concatenate([x, ones_row, jaw_row, zpad3], axis=1)           # (B, CPAD, N)

    # Distance-matmul operands (tiny, built on host side of the kernel):
    #   lhs (channels-last)  x_qry[i]  = [x_i, y_i, z_i, 1, 0..]
    #   rhs (channels-first) x_dist[:,j] = [-2x_j, -2y_j, -2z_j, |x_j|^2, 0..]
    sq = jnp.sum(x * x, axis=1, keepdims=True)                               # (B, 1, N)
    zpad4 = jnp.zeros((B, CPAD - 4, N), jnp.float32)
    x_dist = jnp.concatenate([-2.0 * x, sq, zpad4], axis=1)                  # (B, CPAD, N)
    x_qry = jnp.transpose(
        jnp.concatenate([x, ones_row, zpad4], axis=1), (0, 2, 1))            # (B, N, CPAD)

    bb = _batch_block(B)
    out_cf = pl.pallas_call(
        _fused_kernel,
        out_shape=jax.ShapeDtypeStruct((B, C_OUT, N), jnp.float32),
        grid=(B // bb,),
        in_specs=[
            pl.BlockSpec((bb, CPAD, N), lambda g: (g, 0, 0)),
            pl.BlockSpec((bb, N, CPAD), lambda g: (g, 0, 0)),
            pl.BlockSpec((bb, CPAD, N), lambda g: (g, 0, 0)),
            pl.BlockSpec((C_ALL, CPAD), lambda g: (0, 0)),
        ],
        out_specs=pl.BlockSpec((bb, C_OUT, N), lambda g: (g, 0, 0)),
        compiler_params=pltpu.CompilerParams(
            dimension_semantics=("parallel",)),
    )(x_aug, x_qry, x_dist, w_aug_t)

    if channels_last:
        # Module contract: torch.cat([pe, le], dim=2) in channels-last layout.
        # (Prefer channels_last=False downstream to skip this HBM round-trip.)
        return jnp.transpose(out_cf, (0, 2, 1))                              # (B, N, C_OUT)
    return out_cf                                                            # (B, C_OUT, N)


def init_params(key):
    ks = jax.random.split(key, 6)
    wpe = 0.1 * jax.random.normal(ks[0], (3, C_PE), jnp.float32)
    bpe = 0.01 * jax.random.normal(ks[1], (1, C_PE), jnp.float32)
    wc = 0.1 * jax.random.normal(ks[2], (3, C_LE), jnp.float32)   # weights for x_i
    wn = 0.1 * jax.random.normal(ks[3], (3, C_LE), jnp.float32)   # weights for x_j - x_i
    wj = 0.1 * jax.random.normal(ks[4], (1, C_LE), jnp.float32)   # weights for jaw channel
    bed = 0.01 * jax.random.normal(ks[5], (1, C_LE), jnp.float32)
    return (wpe, bpe, wc, wn, wj, bed)


if __name__ == "__main__":
    key = jax.random.PRNGKey(0)
    kx, kp = jax.random.split(key, 2)
    B = 2
    x = jax.random.normal(kx, (B, 3, N), jnp.float32)             # point cloud, NCW layout
    jaw = jnp.array([0.0, 1.0], jnp.float32)                      # upper / lower jaw flag
    params = init_params(kp)

    out = jax.jit(feature_extractor)(x, jaw, params)
    out = jax.block_until_ready(out)
    assert out.shape == (B, N, C_OUT), out.shape
    assert bool(jnp.all(jnp.isfinite(out)))
    print("KERNEL_OK")
</pallas_src>

<mosaic_0001>
module attributes {stable_mosaic.version = 11 : i64} {
  func.func @_fused_kernel(%arg0: i32, %arg1: memref<1x8x128xf32, #tpu.memory_space<vmem>>, %arg2: memref<1x128x8xf32, #tpu.memory_space<vmem>>, %arg3: memref<1x8x128xf32, #tpu.memory_space<vmem>>, %arg4: memref<256x8xf32, #tpu.memory_space<vmem>>, %arg5: memref<1x192x128xf32, #tpu.memory_space<vmem>>) attributes {dimension_semantics = [#tpu.dimension_semantics<parallel>], iteration_bounds = array<i64: 2>, scalar_prefetch = 0 : i64, scratch_operands = 0 : i64, tpu.core_type = #tpu.core_type<tc>, window_params = [{transform_indices = @transform_0, window_bounds = array<i64: 1, 8, 128>}, {transform_indices = @transform_1, window_bounds = array<i64: 1, 128, 8>}, {transform_indices = @transform_2, window_bounds = array<i64: 1, 8, 128>}, {pipeline_mode = #tpu.pipeline_mode<synchronous>, transform_indices = @transform_3, window_bounds = array<i64: 256, 8>}, {transform_indices = @transform_4, window_bounds = array<i64: 1, 192, 128>}]} {
    %c0 = arith.constant 0 : index
    %c0_0 = arith.constant 0 : index
    %0 = vector.load %arg4[%c0, %c0_0] : memref<256x8xf32, #tpu.memory_space<vmem>>, vector<256x8xf32>
    %c0_i32 = arith.constant 0 : i32
    %1 = arith.index_cast %c0_i32 : i32 to index
    %c0_1 = arith.constant 0 : index
    %c0_2 = arith.constant 0 : index
    %2 = vector.load %arg1[%1, %c0_1, %c0_2] : memref<1x8x128xf32, #tpu.memory_space<vmem>>, vector<1x8x128xf32>
    %3 = vector.shape_cast %2 : vector<1x8x128xf32> to vector<8x128xf32>
    %cst = arith.constant dense<0.000000e+00> : vector<256x128xf32>
    %4 = tpu.matmul %0, %3, %cst {dimension_numbers = #tpu.dot_dimension_numbers<[1], [0], [0], [1], [0, 0, 1, 1], [], []>} : vector<256x8xf32>, vector<8x128xf32>, vector<256x128xf32> -> vector<256x128xf32>
    %5 = vector.extract_strided_slice %4 {offsets = [0, 0], sizes = [128, 128], strides = [1, 1]} : vector<256x128xf32> to vector<128x128xf32>
    %cst_3 = arith.constant 0.000000e+00 : f32
    %6 = vector.broadcast %cst_3 : f32 to vector<128x128xf32>
    %7 = arith.maximumf %5, %6 : vector<128x128xf32>
    %8 = arith.index_cast %c0_i32 : i32 to index
    %c0_4 = arith.constant 0 : index
    %c0_5 = arith.constant 0 : index
    %9 = vector.load %arg5[%8, %c0_4, %c0_5] : memref<1x192x128xf32, #tpu.memory_space<vmem>>, vector<1x128x128xf32>
    %10 = vector.shape_cast %9 : vector<1x128x128xf32> to vector<128x128xf32>
    %11 = vector.shape_cast %7 : vector<128x128xf32> to vector<1x128x128xf32>
    tpu.vector_store %arg5[%8, %c0_4, %c0_5], %11 {strides = array<i32>} : memref<1x192x128xf32, #tpu.memory_space<vmem>>, vector<1x128x128xf32>,
    %12 = vector.extract_strided_slice %4 {offsets = [128, 0], sizes = [64, 128], strides = [1, 1]} : vector<256x128xf32> to vector<64x128xf32>
    %13 = vector.extract_strided_slice %4 {offsets = [192, 0], sizes = [64, 128], strides = [1, 1]} : vector<256x128xf32> to vector<64x128xf32>
    %14 = arith.index_cast %c0_i32 : i32 to index
    %c0_6 = arith.constant 0 : index
    %c0_7 = arith.constant 0 : index
    %15 = vector.load %arg2[%14, %c0_6, %c0_7] : memref<1x128x8xf32, #tpu.memory_space<vmem>>, vector<1x128x8xf32>
    %16 = vector.shape_cast %15 : vector<1x128x8xf32> to vector<128x8xf32>
    %17 = arith.index_cast %c0_i32 : i32 to index
    %c0_8 = arith.constant 0 : index
    %c0_9 = arith.constant 0 : index
    %18 = vector.load %arg3[%17, %c0_8, %c0_9] : memref<1x8x128xf32, #tpu.memory_space<vmem>>, vector<1x8x128xf32>
    %19 = vector.shape_cast %18 : vector<1x8x128xf32> to vector<8x128xf32>
    %cst_10 = arith.constant dense<0.000000e+00> : vector<128x128xf32>
    %20 = tpu.matmul %16, %19, %cst_10 {dimension_numbers = #tpu.dot_dimension_numbers<[1], [0], [0], [1], [0, 0, 1, 1], [], []>} : vector<128x8xf32>, vector<8x128xf32>, vector<128x128xf32> -> vector<128x128xf32>
    %cst_11 = arith.constant 0xFF800000 : f32
    %21 = vector.broadcast %cst_11 : f32 to vector<64x128xf32>
    %c0_i32_12 = arith.constant 0 : i32
    %c8_i32 = arith.constant 8 : i32
    %22 = arith.addi %c0_i32_12, %c8_i32 : i32
    %c1_i32 = arith.constant 1 : i32
    %23:2 = scf.for %arg6 = %c0_i32_12 to %22 step %c1_i32 iter_args(%arg7 = %20, %arg8 = %21) -> (vector<128x128xf32>, vector<64x128xf32>)  : i32 {
      %cst_16 = arith.constant dense<0x7F800000> : vector<128xf32>
      %31 = vector.multi_reduction <minimumf>, %arg7, %cst_16 [1] : vector<128x128xf32> to vector<128xf32>
      %32 = vector.shape_cast %31 : vector<128xf32> to vector<128x1xf32>
      %33 = vector.broadcast %32 : vector<128x1xf32> to vector<128x128xf32>
      %34 = arith.cmpf oeq, %arg7, %33 : vector<128x128xf32>
      %35 = arith.extui %34 : vector<128x128xi1> to vector<128x128xi32>
      %36 = arith.sitofp %35 : vector<128x128xi32> to vector<128x128xf32>
      %cst_17 = arith.constant dense<0.000000e+00> : vector<64x128xf32>
      %37 = tpu.matmul %13, %36, %cst_17 {dimension_numbers = #tpu.dot_dimension_numbers<[1], [1], [0], [0], [0, 0, 1, 0], [], []>} : vector<64x128xf32>, vector<128x128xf32>, vector<64x128xf32> -> vector<64x128xf32>
      %38 = arith.maximumf %arg8, %37 : vector<64x128xf32>
      %cst_18 = arith.constant 3.000000e+38 : f32
      %39 = vector.broadcast %cst_18 : f32 to vector<128x128xf32>
      %40 = arith.select %34, %39, %arg7 : vector<128x128xi1>, vector<128x128xf32>
      scf.yield %40, %38 : vector<128x128xf32>, vector<64x128xf32>
    }
    %24 = arith.addf %12, %23#1 : vector<64x128xf32>
    %cst_13 = arith.constant 0.000000e+00 : f32
    %25 = vector.broadcast %cst_13 : f32 to vector<64x128xf32>
    %26 = arith.maximumf %24, %25 : vector<64x128xf32>
    %27 = arith.index_cast %c0_i32 : i32 to index
    %c128 = arith.constant 128 : index
    %c0_14 = arith.constant 0 : index
    %28 = vector.load %arg5[%27, %c128, %c0_14] : memref<1x192x128xf32, #tpu.memory_space<vmem>>, vector<1x64x128xf32>
    %29 = vector.shape_cast %28 : vector<1x64x128xf32> to vector<64x128xf32>
    %30 = vector.shape_cast %26 : vector<64x128xf32> to vector<1x64x128xf32>
    tpu.vector_store %arg5[%27, %c128, %c0_14], %30 {strides = array<i32>} : memref<1x192x128xf32, #tpu.memory_space<vmem>>, vector<1x64x128xf32>,
    %c1_i32_15 = arith.constant 1 : i32
    return
  }
  func.func @transform_0(%arg0: i32) -> (i32, i32, i32) {
    %c0_i32 = arith.constant 0 : i32
    %c0_i32_0 = arith.constant 0 : i32
    %c0_i32_1 = arith.constant 0 : i32
    return %arg0, %c0_i32, %c0_i32_0 : i32, i32, i32
  }
  func.func @transform_1(%arg0: i32) -> (i32, i32, i32) {
    %c0_i32 = arith.constant 0 : i32
    %c0_i32_0 = arith.constant 0 : i32
    %c0_i32_1 = arith.constant 0 : i32
    return %arg0, %c0_i32, %c0_i32_0 : i32, i32, i32
  }
  func.func @transform_2(%arg0: i32) -> (i32, i32, i32) {
    %c0_i32 = arith.constant 0 : i32
    %c0_i32_0 = arith.constant 0 : i32
    %c0_i32_1 = arith.constant 0 : i32
    return %arg0, %c0_i32, %c0_i32_0 : i32, i32, i32
  }
  func.func @transform_3(%arg0: i32) -> (i32, i32) {
    %c0_i32 = arith.constant 0 : i32
    %c0_i32_0 = arith.constant 0 : i32
    %c0_i32_1 = arith.constant 0 : i32
    return %c0_i32, %c0_i32_0 : i32, i32
  }
  func.func @transform_4(%arg0: i32) -> (i32, i32, i32) {
    %c0_i32 = arith.constant 0 : i32
    %c0_i32_0 = arith.constant 0 : i32
    %c0_i32_1 = arith.constant 0 : i32
    return %arg0, %c0_i32, %c0_i32_0 : i32, i32, i32
  }
}

</mosaic_0001>

<llo_original>
// kernel: sub.1
$region0: #{sub.1}
  #allocation0 [shape = 's32[1]{0}', space=sflag, size = 0x4, scoped, tag = 'scoped memory for sub.1']
  %s0 = inlined_call_operand.vmem [shape: f32[3,64], index: 0, kind: input, shape index: {}]
  %s1 = inlined_call_operand.vmem [shape: f32[3,64], index: 1, kind: input, shape index: {}]
  %s2 = inlined_call_operand.vmem [shape: f32[3,64], index: 2, kind: output, shape index: {}]
  %v3 = vld [vmem:[%s0] sm:$0x7]
  %v4 = vld [vmem:[%s1] sm:$0x7]
  %5 = xla_tuple %v3, %v4
  %6 = xla_tuple %5
  %v7 = vsub.f32 %v3, %v4
  %8 = xla_tuple %v7
  %9 = vst [vmem:[%s2] sm:$0xf] %v7

// kernel: feature_extractor.1
$region0: #{feature_extractor.1}
  #allocation0 [shape = 'u32[]', space=smem, size = 0x4, offset = 0x4, fixed_abs, tag = 'smem constant byte address 0x4 - core index']
  #allocation1 [shape = 'u32[144,128]{1,0:T(1,128)}', space=vmem, size = 0x12000, scoped, tag = 'internal scratch']
  %s0 = inlined_call_operand.vmem [shape: f32[2,8,128], index: 0, kind: input, shape index: {}]
  %s1 = inlined_call_operand.vmem [shape: f32[2,128,8], index: 1, kind: input, shape index: {}]
  %s2 = inlined_call_operand.vmem [shape: f32[2,8,128], index: 2, kind: input, shape index: {}]
  %s3 = inlined_call_operand.vmem [shape: f32[256,8], index: 3, kind: input, shape index: {}]
  %s4 = inlined_call_operand.hbm [shape: f32[2,192,128], index: 4, kind: output, shape index: {}]
  %s5 = sld [smem:[#allocation0]]
  $region56: #{feature_extractor.1} parent=0
    _
  %s7 = ssub.s32 1, %s5
  %s8 = scalar_select 0, %s7, %s5
  $region1: #{feature_extractor.1} parent=0
    #allocation2 [shape = 'u8[196608]{0}', space=vmem, size = 0x30000, scoped, tag = 'output window, operand 0']
    #allocation3 [shape = 's32[2]{0}', space=sflag, size = 0x8, scoped, tag = 'scoped memory for feature_extractor.1']
    %9 = vsyncpa [#allocation3], 0
    %s10 = scalar_lea.sflag [#allocation3], 1
    %11 = vsyncpa %s10, 0
    loop: start=0, step=1, limit=4
    $region2: #{feature_extractor.1} parent=1 // loop_pre_header
      _
    $region3: #{feature_extractor.1} parent=1 // loop_header
      %s13 = sphi 0, %s17
      %p14 = scmp.ge.s32.totalorder %s13, 4
      %s23 = sphi 0, %s25
      %s26 = sphi 0, %s23
      %s27 = sphi 0, %s26
      %s43 = sphi 0, %s27
      %s49 = sphi 0, %s51
      %s52 = sphi 0, %s49
      %s53 = sphi 0, %s52
      %s69 = sphi 0, %s53
      %s75 = sphi 0, %s77
      %s78 = sphi 0, %s75
      %s79 = sphi 0, %s78
      %s95 = sphi 0, %s79
      %s99 = sphi 0, %s99
      %s101 = sphi 0, %s99
      %s102 = sphi 0, %s101
      %s116 = sphi 0, %s102
      %s122 = sphi 0, %s124
      %s125 = sphi 0, %s122
      %s126 = sphi 0, %s125
      %s142 = sphi 0, %s126
    $region4: #{feature_extractor.1} parent=1 // loop_header_branch
      %16 = sbr.rel (%p14) target = $region8
    $region5: #{feature_extractor.1} parent=1 // loop_body
      %s18 = ssub.s32 %s13, 1
      %s19 = ssub.s32 %s13, 2
      %s20 = sadd.s32 %s13, 1
      %s21 = ssub.s32 %s13, %s20
      %p22 = scmp.eq.s32.totalorder %s21, 0
      %s24 = sadd.s32 %s23, 1
      %s25 = scalar_select %p22, %s23, %s24
      %p28 = pneg %p22
      %p29 = scmp.eq.s32.totalorder %s13, 1
      %p30 = por %p28, %p29
      %p31 = scmp.ne.s32.totalorder %s23, %s26
      %p32 = scmp.eq.s32.totalorder %s13, 0
      %p33 = por %p31, %p32
      %p34 = scmp.ne.s32.totalorder %s23, %s26
      %p35 = scmp.eq.s32.totalorder %s18, 1
      %p36 = por %p34, %p35
      %p37 = scmp.ne.s32.totalorder %s26, %s27
      %p38 = scmp.eq.s32.totalorder %s18, 0
      %p39 = por %p37, %p38
      %p40 = scmp.ne.s32.totalorder %s26, %s27
      %p41 = scmp.eq.s32.totalorder %s19, 1
      %p42 = por %p40, %p41
      %p44 = scmp.ne.s32.totalorder %s27, %s43
      %p45 = scmp.eq.s32.totalorder %s19, 0
      %p46 = por %p44, %p45
      %s47 = ssub.s32 %s13, %s20
      %p48 = scmp.eq.s32.totalorder %s47, 0
      %s50 = sadd.s32 %s49, 1
      %s51 = scalar_select %p48, %s49, %s50
      %p54 = pneg %p48
      %p55 = scmp.eq.s32.totalorder %s13, 1
      %p56 = por %p54, %p55
      %p57 = scmp.ne.s32.totalorder %s49, %s52
      %p58 = scmp.eq.s32.totalorder %s13, 0
      %p59 = por %p57, %p58
      %p60 = scmp.ne.s32.totalorder %s49, %s52
      %p61 = scmp.eq.s32.totalorder %s18, 1
      %p62 = por %p60, %p61
      %p63 = scmp.ne.s32.totalorder %s52, %s53
      %p64 = scmp.eq.s32.totalorder %s18, 0
      %p65 = por %p63, %p64
      %p66 = scmp.ne.s32.totalorder %s52, %s53
      %p67 = scmp.eq.s32.totalorder %s19, 1
      %p68 = por %p66, %p67
      %p70 = scmp.ne.s32.totalorder %s53, %s69
      %p71 = scmp.eq.s32.totalorder %s19, 0
      %p72 = por %p70, %p71
      %s73 = ssub.s32 %s13, %s20
      %p74 = scmp.eq.s32.totalorder %s73, 0
      %s76 = sadd.s32 %s75, 1
      %s77 = scalar_select %p74, %s75, %s76
      %p80 = pneg %p74
      %p81 = scmp.eq.s32.totalorder %s13, 1
      %p82 = por %p80, %p81
      %p83 = scmp.ne.s32.totalorder %s75, %s78
      %p84 = scmp.eq.s32.totalorder %s13, 0
      %p85 = por %p83, %p84
      %p86 = scmp.ne.s32.totalorder %s75, %s78
      %p87 = scmp.eq.s32.totalorder %s18, 1
      %p88 = por %p86, %p87
      %p89 = scmp.ne.s32.totalorder %s78, %s79
      %p90 = scmp.eq.s32.totalorder %s18, 0
      %p91 = por %p89, %p90
      %p92 = scmp.ne.s32.totalorder %s78, %s79
      %p93 = scmp.eq.s32.totalorder %s19, 1
      %p94 = por %p92, %p93
      %p96 = scmp.ne.s32.totalorder %s79, %s95
      %p97 = scmp.eq.s32.totalorder %s19, 0
      %p98 = por %p96, %p97
      %s100 = sadd.s32 %s99, 1
      %p103 = scmp.eq.s32.totalorder %s13, 1
      %p104 = scmp.ne.s32.totalorder %s99, %s101
      %p105 = scmp.eq.s32.totalorder %s13, 0
      %p106 = por %p104, %p105
      %p107 = scmp.ne.s32.totalorder %s99, %s101
      %p108 = scmp.eq.s32.totalorder %s18, 1
      %p109 = por %p107, %p108
      %p110 = scmp.ne.s32.totalorder %s101, %s102
      %p111 = scmp.eq.s32.totalorder %s18, 0
      %p112 = por %p110, %p111
      %p113 = scmp.ne.s32.totalorder %s101, %s102
      %p114 = scmp.eq.s32.totalorder %s19, 1
      %p115 = por %p113, %p114
      %p117 = scmp.ne.s32.totalorder %s102, %s116
      %p118 = scmp.eq.s32.totalorder %s19, 0
      %p119 = por %p117, %p118
      %s120 = ssub.s32 %s13, %s20
      %p121 = scmp.eq.s32.totalorder %s120, 0
      %s123 = sadd.s32 %s122, 1
      %s124 = scalar_select %p121, %s122, %s123
      %p127 = pneg %p121
      %p128 = scmp.eq.s32.totalorder %s13, 1
      %p129 = por %p127, %p128
      %p130 = scmp.ne.s32.totalorder %s122, %s125
      %p131 = scmp.eq.s32.totalorder %s13, 0
      %p132 = por %p130, %p131
      %p133 = scmp.ne.s32.totalorder %s122, %s125
      %p134 = scmp.eq.s32.totalorder %s18, 1
      %p135 = por %p133, %p134
      %p136 = scmp.ne.s32.totalorder %s125, %s126
      %p137 = scmp.eq.s32.totalorder %s18, 0
      %p138 = por %p136, %p137
      %p139 = scmp.ne.s32.totalorder %s125, %s126
      %p140 = scmp.eq.s32.totalorder %s19, 1
      %p141 = por %p139, %p140
      %p143 = scmp.ne.s32.totalorder %s126, %s142
      %p144 = scmp.eq.s32.totalorder %s19, 0
      %p145 = por %p143, %p144
      %p146 = scmp.le.s32.totalorder 1, %s13
      %p147 = scmp.lt.s32.totalorder %s13, 3
      %p148 = pnand %p146, %p147
      %p149 = pneg %p148
      // Predicated region
      $region9: #{feature_extractor.1} parent=5 // pred_check
        _
      $region10: #{feature_extractor.1} parent=5 // pred_check_branch
        %151 = sbr.rel (%p148) target = $region12
      $region11: #{feature_extractor.1} parent=5 // pred_region
        %s152 = ssub.s32 %s13, 1
        // Predicated region
        $region13: #{feature_extractor.1} parent=11 // pred_check
          %p153 = pneg %p112
        $region14: #{feature_extractor.1} parent=11 // pred_check_branch
          %155 = sbr.rel (%p153) target = $region16
        $region15: #{feature_extractor.1} parent=11 // pred_region
          _
        $region16: #{feature_extractor.1} parent=11 // pred_fallthru
          _
      $region12: #{feature_extractor.1} parent=5 // pred_fallthru
        _
      %p156 = scmp.lt.s32.totalorder %s13, 2
      // Predicated region
      $region17: #{feature_extractor.1} parent=5 // pred_check
        %p157 = pneg %p156
      $region18: #{feature_extractor.1} parent=5 // pred_check_branch
        %159 = sbr.rel (%p157) target = $region20
      $region19: #{feature_extractor.1} parent=5 // pred_region
        // Predicated region
        $region21: #{feature_extractor.1} parent=19 // pred_check
          %p160 = pneg %p33
        $region22: #{feature_extractor.1} parent=19 // pred_check_branch
          %162 = sbr.rel (%p160) target = $region24
        $region23: #{feature_extractor.1} parent=19 // pred_region
          %p163 = scmp.lt.s32.totalorder %s13, 1
          %s164 = scalar_select %p163, %s13, 1
          %s165 = smul.addr %s164, 8
          %s166 = scalar_lea.vmem %s0, %s165
        $region24: #{feature_extractor.1} parent=19 // pred_fallthru
          _
        // Predicated region
        $region25: #{feature_extractor.1} parent=19 // pred_check
          %p167 = pneg %p59
        $region26: #{feature_extractor.1} parent=19 // pred_check_branch
          %169 = sbr.rel (%p167) target = $region28
        $region27: #{feature_extractor.1} parent=19 // pred_region
          %p170 = scmp.lt.s32.totalorder %s13, 1
          %s171 = scalar_select %p170, %s13, 1
          %s172 = smul.addr %s171, 16
          %s173 = smul.addr %s172, 8
          %s174 = scalar_lea.vmem %s1, %s173
        $region28: #{feature_extractor.1} parent=19 // pred_fallthru
          _
        // Predicated region
        $region29: #{feature_extractor.1} parent=19 // pred_check
          %p175 = pneg %p85
        $region30: #{feature_extractor.1} parent=19 // pred_check_branch
          %177 = sbr.rel (%p175) target = $region32
        $region31: #{feature_extractor.1} parent=19 // pred_region
          %p178 = scmp.lt.s32.totalorder %s13, 1
          %s179 = scalar_select %p178, %s13, 1
          %s180 = smul.addr %s179, 8
          %s181 = scalar_lea.vmem %s2, %s180
        $region32: #{feature_extractor.1} parent=19 // pred_fallthru
          _
      $region20: #{feature_extractor.1} parent=5 // pred_fallthru
        _
      %p182 = scmp.le.s32.totalorder 1, %s13
      %p183 = scmp.lt.s32.totalorder %s13, 3
      %p184 = pnand %p182, %p183
      %p185 = pneg %p184
      // Predicated region
      $region33: #{feature_extractor.1} parent=5 // pred_check
        _
      $region34: #{feature_extractor.1} parent=5 // pred_check_branch
        %187 = sbr.rel (%p184) target = $region36
      $region35: #{feature_extractor.1} parent=5 // pred_region
        %s188 = ssub.s32 %s13, 1
        %p189 = scmp.lt.s32.totalorder %s18, 1
        %s190 = scalar_select %p189, %s18, 1
        %s191 = smul.addr %s190, 8
        %s192 = scalar_lea.vmem %s0, %s191
        %p193 = pneg %p39
        %p194 = pneg %p36
        %p195 = scmp.lt.s32.totalorder %s18, 1
        %s196 = scalar_select %p195, %s18, 1
        %s197 = smul.addr %s196, 16
        %s198 = smul.addr %s197, 8
        %s199 = scalar_lea.vmem %s1, %s198
        %p200 = pneg %p65
        %p201 = pneg %p62
        %p202 = scmp.lt.s32.totalorder %s18, 1
        %s203 = scalar_select %p202, %s18, 1
        %s204 = smul.addr %s203, 8
        %s205 = scalar_lea.vmem %s2, %s204
        %p206 = pneg %p91
        %p207 = pneg %p88
        %p208 = pneg %p112
        %p209 = pneg %p109
        %p210 = pneg %p138
        %p211 = pneg %p135
        %s212 = sand.u32 %s125, 1
        %s213 = scalar_lea.sflag [#allocation3], %s212
        %s214 = sand.u32 %s125, 1
        %s215 = smul.addr %s214, 192
        %s216 = scalar_lea.vmem [#allocation2], %s215
        %p217 = scmp.lt.s32.totalorder %s18, 1
        %s218 = scalar_select %p217, %s18, 1
        %s219 = smul.addr %s218, 8
        %s220 = scalar_lea.vmem %s0, %s219
        %p221 = scmp.lt.s32.totalorder %s18, 1
        %s222 = scalar_select %p221, %s18, 1
        %s223 = smul.addr %s222, 16
        %s224 = smul.addr %s223, 8
        %s225 = scalar_lea.vmem %s1, %s224
        %p226 = scmp.lt.s32.totalorder %s18, 1
        %s227 = scalar_select %p226, %s18, 1
        %s228 = smul.addr %s227, 8
        %s229 = scalar_lea.vmem %s2, %s228
        %v230 = vld [vmem:[%s3] sm:$0xff]
        %v231 = vld [vmem:[%s3 + $0x8] sm:$0xff]
        %v232 = vld [vmem:[%s3 + $0x10] sm:$0xff]
        %v233 = vld [vmem:[%s3 + $0x18] sm:$0xff]
        %v234 = vld [vmem:[%s3 + $0x20] sm:$0xff]
        %v235 = vld [vmem:[%s3 + $0x28] sm:$0xff]
        %v236 = vld [vmem:[%s3 + $0x30] sm:$0xff]
        %v237 = vld [vmem:[%s3 + $0x38] sm:$0xff]
        %v238 = vld [vmem:[%s3 + $0x40] sm:$0xff]
        %v239 = vld [vmem:[%s3 + $0x48] sm:$0xff]
        %v240 = vld [vmem:[%s3 + $0x50] sm:$0xff]
        %v241 = vld [vmem:[%s3 + $0x58] sm:$0xff]
        %v242 = vld [vmem:[%s3 + $0x60] sm:$0xff]
        %v243 = vld [vmem:[%s3 + $0x68] sm:$0xff]
        %v244 = vld [vmem:[%s3 + $0x70] sm:$0xff]
        %v245 = vld [vmem:[%s3 + $0x78] sm:$0xff]
        %v246 = vld [vmem:[%s3 + $0x80] sm:$0xff]
        %v247 = vld [vmem:[%s3 + $0x88] sm:$0xff]
        %v248 = vld [vmem:[%s3 + $0x90] sm:$0xff]
        %v249 = vld [vmem:[%s3 + $0x98] sm:$0xff]
        %v250 = vld [vmem:[%s3 + $0xa0] sm:$0xff]
        %v251 = vld [vmem:[%s3 + $0xa8] sm:$0xff]
        %v252 = vld [vmem:[%s3 + $0xb0] sm:$0xff]
        %v253 = vld [vmem:[%s3 + $0xb8] sm:$0xff]
        %v254 = vld [vmem:[%s3 + $0xc0] sm:$0xff]
        %v255 = vld [vmem:[%s3 + $0xc8] sm:$0xff]
        %v256 = vld [vmem:[%s3 + $0xd0] sm:$0xff]
        %v257 = vld [vmem:[%s3 + $0xd8] sm:$0xff]
        %v258 = vld [vmem:[%s3 + $0xe0] sm:$0xff]
        %v259 = vld [vmem:[%s3 + $0xe8] sm:$0xff]
        %v260 = vld [vmem:[%s3 + $0xf0] sm:$0xff]
        %v261 = vld [vmem:[%s3 + $0xf8] sm:$0xff]
        %v262 = vld [vmem:[%s220] sm:$0xff]
        %vm263 = vcmask 64512
        %v265 = vsel %vm263, %v230, 0
        %v268 = vsel %vm263, %v231, 0
        %v271 = vsel %vm263, %v232, 0
        %v274 = vsel %vm263, %v233, 0
        %v277 = vsel %vm263, %v234, 0
        %v280 = vsel %vm263, %v235, 0
        %v283 = vsel %vm263, %v236, 0
        %v286 = vsel %vm263, %v237, 0
        %v289 = vsel %vm263, %v238, 0
        %v292 = vsel %vm263, %v239, 0
        %v295 = vsel %vm263, %v240, 0
        %v298 = vsel %vm263, %v241, 0
        %v301 = vsel %vm263, %v242, 0
        %v304 = vsel %vm263, %v243, 0
        %v307 = vsel %vm263, %v244, 0
        %v310 = vsel %vm263, %v245, 0
        %v313 = vsel %vm263, %v246, 0
        %v316 = vsel %vm263, %v247, 0
        %v319 = vsel %vm263, %v248, 0
        %v322 = vsel %vm263, %v249, 0
        %v325 = vsel %vm263, %v250, 0
        %v328 = vsel %vm263, %v251, 0
        %v331 = vsel %vm263, %v252, 0
        %v334 = vsel %vm263, %v253, 0
        %v337 = vsel %vm263, %v254, 0
        %v340 = vsel %vm263, %v255, 0
        %v343 = vsel %vm263, %v256, 0
        %v346 = vsel %vm263, %v257, 0
        %v349 = vsel %vm263, %v258, 0
        %v352 = vsel %vm263, %v259, 0
        %v355 = vsel %vm263, %v260, 0
        %v358 = vsel %vm263, %v261, 0
        %360 = vmatprep.subr.mxu0 0.0
        %361 = vmatpush1.msra.mxu0 %v262
        %362 = vmatprep.subr.mxu0 0.0
        %363 = vmatpush1.msra.mxu0 0.0
        %364 = vmatprep.subr.mxu0 0.0
        %365 = vmatpush1.msra.mxu0 0.0
        %366 = vmatprep.subr.mxu0 0.0
        %367 = vmatpush1.msra.mxu0 0.0
        %368 = vmatprep.subr.mxu0 0.0
        %369 = vmatpush1.msra.mxu0 0.0
        %370 = vmatprep.subr.mxu0 0.0
        %371 = vmatpush1.msra.mxu0 0.0
        %372 = vmatprep.subr.mxu0 0.0
        %373 = vmatpush1.msra.mxu0 0.0
        %374 = vmatprep.subr.mxu0 0.0
        %375 = vmatpush1.msra.mxu0 0.0
        %376 = vmatprep.subr.mxu0 0.0
        %377 = vmatpush1.msra.mxu0 0.0
        %378 = vmatprep.subr.mxu0 0.0
        %379 = vmatpush1.msra.mxu0 0.0
        %380 = vmatprep.subr.mxu0 0.0
        %381 = vmatpush1.msra.mxu0 0.0
        %382 = vmatprep.subr.mxu0 0.0
        %383 = vmatpush1.msra.mxu0 0.0
        %384 = vmatprep.subr.mxu0 0.0
        %385 = vmatpush1.msra.mxu0 0.0
        %386 = vmatprep.subr.mxu0 0.0
        %387 = vmatpush1.msra.mxu0 0.0
        %388 = vmatprep.subr.mxu0 0.0
        %389 = vmatpush1.msra.mxu0 0.0
        %390 = vmatprep.subr.mxu0 0.0
        %391 = vmatpush1.msra.mxu0 0.0
        %392 = vmatprep.subr.mxu0 0.0
        %393 = vmatpush1.msra.mxu0 0.0
        %394 = vmatprep.subr.mxu0 0.0
        %395 = vmatpush1.msra.mxu0 0.0
        %396 = vmatprep.subr.mxu0 0.0
        %397 = vmatpush1.msra.mxu0 0.0
        %398 = vmatprep.subr.mxu0 0.0
        %399 = vmatpush1.msra.mxu0 0.0
        %400 = vmatprep.subr.mxu0 0.0
        %401 = vmatpush1.msra.mxu0 0.0
        %402 = vmatprep.subr.mxu0 0.0
        %403 = vmatpush1.msra.mxu0 0.0
        %404 = vmatprep.subr.mxu0 0.0
        %405 = vmatpush1.msra.mxu0 0.0
        %406 = vmatprep.subr.mxu0 0.0
        %407 = vmatpush1.msra.mxu0 0.0
        %408 = vmatprep.subr.mxu0 0.0
        %409 = vmatpush1.msra.mxu0 0.0
        %410 = vmatprep.subr.mxu0 0.0
        %411 = vmatpush1.msra.mxu0 0.0
        %412 = vmatprep.subr.mxu0 0.0
        %413 = vmatpush1.msra.mxu0 0.0
        %414 = vmatprep.subr.mxu0 0.0
        %415 = vmatpush1.msra.mxu0 0.0
        %416 = vmatprep.subr.mxu0 0.0
        %417 = vmatpush1.msra.mxu0 0.0
        %418 = vmatprep.subr.mxu0 0.0
        %419 = vmatpush1.msra.mxu0 0.0
        %420 = vmatprep.subr.mxu0 0.0
        %421 = vmatpush1.msra.mxu0 0.0
        %422 = vmatprep.subr.mxu0 0.0
        %423 = vmatpush1.msra.mxu0 0.0
        %424 = vmatprep.mubr.f32.mxu0 0.0
        %425 = vmatmul.mubr.f32.gmra.mrb[0].mxu0 %v265
        %v426 = vpop.f32.mrb[0].mxu0
        %v427 = vadd.f32 0.0, %v426
        %v428 = vpop.f32.mrb[0].mxu0
        %429 = vmatprep.mubr.f32.mxu0 0.0
        %430 = vmatmul.mubr.f32.gmra.mrb[0].mxu0 %v268
        %v431 = vpop.f32.mrb[0].mxu0
        %v432 = vadd.f32 0.0, %v431
        %v433 = vpop.f32.mrb[0].mxu0
        %434 = vmatprep.mubr.f32.mxu0 0.0
        %435 = vmatmul.mubr.f32.gmra.mrb[0].mxu0 %v271
        %v436 = vpop.f32.mrb[0].mxu0
        %v437 = vadd.f32 0.0, %v436
        %v438 = vpop.f32.mrb[0].mxu0
        %439 = vmatprep.mubr.f32.mxu0 0.0
        %440 = vmatmul.mubr.f32.gmra.mrb[0].mxu0 %v274
        %v441 = vpop.f32.mrb[0].mxu0
        %v442 = vadd.f32 0.0, %v441
        %v443 = vpop.f32.mrb[0].mxu0
        %444 = vmatprep.mubr.f32.mxu0 0.0
        %445 = vmatmul.mubr.f32.gmra.mrb[0].mxu0 %v277
        %v446 = vpop.f32.mrb[0].mxu0
        %v447 = vadd.f32 0.0, %v446
        %v448 = vpop.f32.mrb[0].mxu0
        %449 = vmatprep.mubr.f32.mxu0 0.0
        %450 = vmatmul.mubr.f32.gmra.mrb[0].mxu0 %v280
        %v451 = vpop.f32.mrb[0].mxu0
        %v452 = vadd.f32 0.0, %v451
        %v453 = vpop.f32.mrb[0].mxu0
        %454 = vmatprep.mubr.f32.mxu0 0.0
        %455 = vmatmul.mubr.f32.gmra.mrb[0].mxu0 %v283
        %v456 = vpop.f32.mrb[0].mxu0
        %v457 = vadd.f32 0.0, %v456
        %v458 = vpop.f32.mrb[0].mxu0
        %459 = vmatprep.mubr.f32.mxu0 0.0
        %460 = vmatmul.mubr.f32.gmra.mrb[0].mxu0 %v286
        %v461 = vpop.f32.mrb[0].mxu0
        %v462 = vadd.f32 0.0, %v461
        %v463 = vpop.f32.mrb[0].mxu0
        %464 = vmatprep.mubr.f32.mxu0 0.0
        %465 = vmatmul.mubr.f32.gmra.mrb[0].mxu0 %v289
        %v466 = vpop.f32.mrb[0].mxu0
        %v467 = vadd.f32 0.0, %v466
        %v468 = vpop.f32.mrb[0].mxu0
        %469 = vmatprep.mubr.f32.mxu0 0.0
        %470 = vmatmul.mubr.f32.gmra.mrb[0].mxu0 %v292
        %v471 = vpop.f32.mrb[0].mxu0
        %v472 = vadd.f32 0.0, %v471
        %v473 = vpop.f32.mrb[0].mxu0
        %474 = vmatprep.mubr.f32.mxu0 0.0
        %475 = vmatmul.mubr.f32.gmra.mrb[0].mxu0 %v295
        %v476 = vpop.f32.mrb[0].mxu0
        %v477 = vadd.f32 0.0, %v476
        %v478 = vpop.f32.mrb[0].mxu0
        %479 = vmatprep.mubr.f32.mxu0 0.0
        %480 = vmatmul.mubr.f32.gmra.mrb[0].mxu0 %v298
        %v481 = vpop.f32.mrb[0].mxu0
        %v482 = vadd.f32 0.0, %v481
        %v483 = vpop.f32.mrb[0].mxu0
        %484 = vmatprep.mubr.f32.mxu0 0.0
        %485 = vmatmul.mubr.f32.gmra.mrb[0].mxu0 %v301
        %v486 = vpop.f32.mrb[0].mxu0
        %v487 = vadd.f32 0.0, %v486
        %v488 = vpop.f32.mrb[0].mxu0
        %489 = vmatprep.mubr.f32.mxu0 0.0
        %490 = vmatmul.mubr.f32.gmra.mrb[0].mxu0 %v304
        %v491 = vpop.f32.mrb[0].mxu0
        %v492 = vadd.f32 0.0, %v491
        %v493 = vpop.f32.mrb[0].mxu0
        %494 = vmatprep.mubr.f32.mxu0 0.0
        %495 = vmatmul.mubr.f32.gmra.mrb[0].mxu0 %v307
        %v496 = vpop.f32.mrb[0].mxu0
        %v497 = vadd.f32 0.0, %v496
        %v498 = vpop.f32.mrb[0].mxu0
        %499 = vmatprep.mubr.f32.mxu0 0.0
        %500 = vmatmul.mubr.f32.gmra.mrb[0].mxu0 %v310
        %v501 = vpop.f32.mrb[0].mxu0
        %v502 = vadd.f32 0.0, %v501
        %v503 = vpop.f32.mrb[0].mxu0
        %504 = vmatprep.mubr.f32.mxu0 0.0
        %505 = vmatmul.mubr.f32.gmra.mrb[0].mxu0 %v313
        %v506 = vpop.f32.mrb[0].mxu0
        %v507 = vadd.f32 0.0, %v506
        %v508 = vpop.f32.mrb[0].mxu0
        %509 = vmatprep.mubr.f32.mxu0 0.0
        %510 = vmatmul.mubr.f32.gmra.mrb[0].mxu0 %v316
        %v511 = vpop.f32.mrb[0].mxu0
        %v512 = vadd.f32 0.0, %v511
        %v513 = vpop.f32.mrb[0].mxu0
        %514 = vmatprep.mubr.f32.mxu0 0.0
        %515 = vmatmul.mubr.f32.gmra.mrb[0].mxu0 %v319
        %v516 = vpop.f32.mrb[0].mxu0
        %v517 = vadd.f32 0.0, %v516
        %v518 = vpop.f32.mrb[0].mxu0
        %519 = vmatprep.mubr.f32.mxu0 0.0
        %520 = vmatmul.mubr.f32.gmra.mrb[0].mxu0 %v322
        %v521 = vpop.f32.mrb[0].mxu0
        %v522 = vadd.f32 0.0, %v521
        %v523 = vpop.f32.mrb[0].mxu0
        %524 = vmatprep.mubr.f32.mxu0 0.0
        %525 = vmatmul.mubr.f32.gmra.mrb[0].mxu0 %v325
        %v526 = vpop.f32.mrb[0].mxu0
        %v527 = vadd.f32 0.0, %v526
        %v528 = vpop.f32.mrb[0].mxu0
        %529 = vmatprep.mubr.f32.mxu0 0.0
        %530 = vmatmul.mubr.f32.gmra.mrb[0].mxu0 %v328
        %v531 = vpop.f32.mrb[0].mxu0
        %v532 = vadd.f32 0.0, %v531
        %v533 = vpop.f32.mrb[0].mxu0
        %534 = vmatprep.mubr.f32.mxu0 0.0
        %535 = vmatmul.mubr.f32.gmra.mrb[0].mxu0 %v331
        %v536 = vpop.f32.mrb[0].mxu0
        %v537 = vadd.f32 0.0, %v536
        %v538 = vpop.f32.mrb[0].mxu0
        %539 = vmatprep.mubr.f32.mxu0 0.0
        %540 = vmatmul.mubr.f32.gmra.mrb[0].mxu0 %v334
        %v541 = vpop.f32.mrb[0].mxu0
        %v542 = vadd.f32 0.0, %v541
        %v543 = vpop.f32.mrb[0].mxu0
        %544 = vmatprep.mubr.f32.mxu0 0.0
        %545 = vmatmul.mubr.f32.gmra.mrb[0].mxu0 %v337
        %v546 = vpop.f32.mrb[0].mxu0
        %v547 = vadd.f32 0.0, %v546
        %v548 = vpop.f32.mrb[0].mxu0
        %549 = vmatprep.mubr.f32.mxu0 0.0
        %550 = vmatmul.mubr.f32.gmra.mrb[0].mxu0 %v340
        %v551 = vpop.f32.mrb[0].mxu0
        %v552 = vadd.f32 0.0, %v551
        %v553 = vpop.f32.mrb[0].mxu0
        %554 = vmatprep.mubr.f32.mxu0 0.0
        %555 = vmatmul.mubr.f32.gmra.mrb[0].mxu0 %v343
        %v556 = vpop.f32.mrb[0].mxu0
        %v557 = vadd.f32 0.0, %v556
        %v558 = vpop.f32.mrb[0].mxu0
        %559 = vmatprep.mubr.f32.mxu0 0.0
        %560 = vmatmul.mubr.f32.gmra.mrb[0].mxu0 %v346
        %v561 = vpop.f32.mrb[0].mxu0
        %v562 = vadd.f32 0.0, %v561
        %v563 = vpop.f32.mrb[0].mxu0
        %564 = vmatprep.mubr.f32.mxu0 0.0
        %565 = vmatmul.mubr.f32.gmra.mrb[0].mxu0 %v349
        %v566 = vpop.f32.mrb[0].mxu0
        %v567 = vadd.f32 0.0, %v566
        %v568 = vpop.f32.mrb[0].mxu0
        %569 = vmatprep.mubr.f32.mxu0 0.0
        %570 = vmatmul.mubr.f32.gmra.mrb[0].mxu0 %v352
        %v571 = vpop.f32.mrb[0].mxu0
        %v572 = vadd.f32 0.0, %v571
        %v573 = vpop.f32.mrb[0].mxu0
        %574 = vmatprep.mubr.f32.mxu0 0.0
        %575 = vmatmul.mubr.f32.gmra.mrb[0].mxu0 %v355
        %v576 = vpop.f32.mrb[0].mxu0
        %v577 = vadd.f32 0.0, %v576
        %v578 = vpop.f32.mrb[0].mxu0
        %579 = vmatprep.mubr.f32.mxu0 0.0
        %580 = vmatmul.mubr.f32.gmra.mrb[0].mxu0 %v358
        %v581 = vpop.f32.mrb[0].mxu0
        %v582 = vadd.f32 0.0, %v581
        %v583 = vpop.f32.mrb[0].mxu0
        %584 = vdwg.mxu0
        %v585 = vmax.f32 %v427, 0.0
        %v586 = vmax.f32 %v432, 0.0
        %v587 = vmax.f32 %v437, 0.0
        %v588 = vmax.f32 %v442, 0.0
        %v589 = vmax.f32 %v447, 0.0
        %v590 = vmax.f32 %v452, 0.0
        %v591 = vmax.f32 %v457, 0.0
        %v592 = vmax.f32 %v462, 0.0
        %v593 = vmax.f32 %v467, 0.0
        %v594 = vmax.f32 %v472, 0.0
        %v595 = vmax.f32 %v477, 0.0
        %v596 = vmax.f32 %v482, 0.0
        %v597 = vmax.f32 %v487, 0.0
        %v598 = vmax.f32 %v492, 0.0
        %v599 = vmax.f32 %v497, 0.0
        %v600 = vmax.f32 %v502, 0.0
        %601 = vst [vmem:[%s216] sm:$0xff] %v585
        %602 = vst [vmem:[%s216 + $0x8] sm:$0xff] %v586
        %603 = vst [vmem:[%s216 + $0x10] sm:$0xff] %v587
        %604 = vst [vmem:[%s216 + $0x18] sm:$0xff] %v588
        %605 = vst [vmem:[%s216 + $0x20] sm:$0xff] %v589
        %606 = vst [vmem:[%s216 + $0x28] sm:$0xff] %v590
        %607 = vst [vmem:[%s216 + $0x30] sm:$0xff] %v591
        %608 = vst [vmem:[%s216 + $0x38] sm:$0xff] %v592
        %609 = vst [vmem:[%s216 + $0x40] sm:$0xff] %v593
        %610 = vst [vmem:[%s216 + $0x48] sm:$0xff] %v594
        %611 = vst [vmem:[%s216 + $0x50] sm:$0xff] %v595
        %612 = vst [vmem:[%s216 + $0x58] sm:$0xff] %v596
        %613 = vst [vmem:[%s216 + $0x60] sm:$0xff] %v597
        %614 = vst [vmem:[%s216 + $0x68] sm:$0xff] %v598
        %615 = vst [vmem:[%s216 + $0x70] sm:$0xff] %v599
        %616 = vst [vmem:[%s216 + $0x78] sm:$0xff] %v600
        %v617 = vld [vmem:[%s225] sm:$0xff]
        %v618 = vld [vmem:[%s225 + $0x8] sm:$0xff]
        %v619 = vld [vmem:[%s225 + $0x10] sm:$0xff]
        %v620 = vld [vmem:[%s225 + $0x18] sm:$0xff]
        %v621 = vld [vmem:[%s225 + $0x20] sm:$0xff]
        %v622 = vld [vmem:[%s225 + $0x28] sm:$0xff]
        %v623 = vld [vmem:[%s225 + $0x30] sm:$0xff]
        %v624 = vld [vmem:[%s225 + $0x38] sm:$0xff]
        %v625 = vld [vmem:[%s225 + $0x40] sm:$0xff]
        %v626 = vld [vmem:[%s225 + $0x48] sm:$0xff]
        %v627 = vld [vmem:[%s225 + $0x50] sm:$0xff]
        %v628 = vld [vmem:[%s225 + $0x58] sm:$0xff]
        %v629 = vld [vmem:[%s225 + $0x60] sm:$0xff]
        %v630 = vld [vmem:[%s225 + $0x68] sm:$0xff]
        %v631 = vld [vmem:[%s225 + $0x70] sm:$0xff]
        %v632 = vld [vmem:[%s225 + $0x78] sm:$0xff]
        %v633 = vld [vmem:[%s229] sm:$0xff]
        %v635 = vsel %vm263, %v617, 0
        %v638 = vsel %vm263, %v618, 0
        %v641 = vsel %vm263, %v619, 0
        %v644 = vsel %vm263, %v620, 0
        %v647 = vsel %vm263, %v621, 0
        %v650 = vsel %vm263, %v622, 0
        %v653 = vsel %vm263, %v623, 0
        %v656 = vsel %vm263, %v624, 0
        %v659 = vsel %vm263, %v625, 0
        %v662 = vsel %vm263, %v626, 0
        %v665 = vsel %vm263, %v627, 0
        %v668 = vsel %vm263, %v628, 0
        %v671 = vsel %vm263, %v629, 0
        %v674 = vsel %vm263, %v630, 0
        %v677 = vsel %vm263, %v631, 0
        %v680 = vsel %vm263, %v632, 0
        %682 = vmatprep.subr.mxu0 0.0
        %683 = vmatpush1.msra.mxu0 %v633
        %684 = vmatprep.subr.mxu0 0.0
        %685 = vmatpush1.msra.mxu0 0.0
        %686 = vmatprep.subr.mxu0 0.0
        %687 = vmatpush1.msra.mxu0 0.0
        %688 = vmatprep.subr.mxu0 0.0
        %689 = vmatpush1.msra.mxu0 0.0
        %690 = vmatprep.subr.mxu0 0.0
        %691 = vmatpush1.msra.mxu0 0.0
        %692 = vmatprep.subr.mxu0 0.0
        %693 = vmatpush1.msra.mxu0 0.0
        %694 = vmatprep.subr.mxu0 0.0
        %695 = vmatpush1.msra.mxu0 0.0
        %696 = vmatprep.subr.mxu0 0.0
        %697 = vmatpush1.msra.mxu0 0.0
        %698 = vmatprep.subr.mxu0 0.0
        %699 = vmatpush1.msra.mxu0 0.0
        %700 = vmatprep.subr.mxu0 0.0
        %701 = vmatpush1.msra.mxu0 0.0
        %702 = vmatprep.subr.mxu0 0.0
        %703 = vmatpush1.msra.mxu0 0.0
        %704 = vmatprep.subr.mxu0 0.0
        %705 = vmatpush1.msra.mxu0 0.0
        %706 = vmatprep.subr.mxu0 0.0
        %707 = vmatpush1.msra.mxu0 0.0
        %708 = vmatprep.subr.mxu0 0.0
        %709 = vmatpush1.msra.mxu0 0.0
        %710 = vmatprep.subr.mxu0 0.0
        %711 = vmatpush1.msra.mxu0 0.0
        %712 = vmatprep.subr.mxu0 0.0
        %713 = vmatpush1.msra.mxu0 0.0
        %714 = vmatprep.subr.mxu0 0.0
        %715 = vmatpush1.msra.mxu0 0.0
        %716 = vmatprep.subr.mxu0 0.0
        %717 = vmatpush1.msra.mxu0 0.0
        %718 = vmatprep.subr.mxu0 0.0
        %719 = vmatpush1.msra.mxu0 0.0
        %720 = vmatprep.subr.mxu0 0.0
        %721 = vmatpush1.msra.mxu0 0.0
        %722 = vmatprep.subr.mxu0 0.0
        %723 = vmatpush1.msra.mxu0 0.0
        %724 = vmatprep.subr.mxu0 0.0
        %725 = vmatpush1.msra.mxu0 0.0
        %726 = vmatprep.subr.mxu0 0.0
        %727 = vmatpush1.msra.mxu0 0.0
        %728 = vmatprep.subr.mxu0 0.0
        %729 = vmatpush1.msra.mxu0 0.0
        %730 = vmatprep.subr.mxu0 0.0
        %731 = vmatpush1.msra.mxu0 0.0
        %732 = vmatprep.subr.mxu0 0.0
        %733 = vmatpush1.msra.mxu0 0.0
        %734 = vmatprep.subr.mxu0 0.0
        %735 = vmatpush1.msra.mxu0 0.0
        %736 = vmatprep.subr.mxu0 0.0
        %737 = vmatpush1.msra.mxu0 0.0
        %738 = vmatprep.subr.mxu0 0.0
        %739 = vmatpush1.msra.mxu0 0.0
        %740 = vmatprep.subr.mxu0 0.0
        %741 = vmatpush1.msra.mxu0 0.0
        %742 = vmatprep.subr.mxu0 0.0
        %743 = vmatpush1.msra.mxu0 0.0
        %744 = vmatprep.subr.mxu0 0.0
        %745 = vmatpush1.msra.mxu0 0.0
        %746 = vmatprep.mubr.f32.mxu0 0.0
        %747 = vmatmul.mubr.f32.gmra.mrb[0].mxu0 %v635
        %v748 = vpop.f32.mrb[0].mxu0
        %v749 = vadd.f32 0.0, %v748
        %v750 = vpop.f32.mrb[0].mxu0
        %751 = vmatprep.mubr.f32.mxu0 0.0
        %752 = vmatmul.mubr.f32.gmra.mrb[0].mxu0 %v638
        %v753 = vpop.f32.mrb[0].mxu0
        %v754 = vadd.f32 0.0, %v753
        %v755 = vpop.f32.mrb[0].mxu0
        %756 = vmatprep.mubr.f32.mxu0 0.0
        %757 = vmatmul.mubr.f32.gmra.mrb[0].mxu0 %v641
        %v758 = vpop.f32.mrb[0].mxu0
        %v759 = vadd.f32 0.0, %v758
        %v760 = vpop.f32.mrb[0].mxu0
        %761 = vmatprep.mubr.f32.mxu0 0.0
        %762 = vmatmul.mubr.f32.gmra.mrb[0].mxu0 %v644
        %v763 = vpop.f32.mrb[0].mxu0
        %v764 = vadd.f32 0.0, %v763
        %v765 = vpop.f32.mrb[0].mxu0
        %766 = vmatprep.mubr.f32.mxu0 0.0
        %767 = vmatmul.mubr.f32.gmra.mrb[0].mxu0 %v647
        %v768 = vpop.f32.mrb[0].mxu0
        %v769 = vadd.f32 0.0, %v768
        %v770 = vpop.f32.mrb[0].mxu0
        %771 = vmatprep.mubr.f32.mxu0 0.0
        %772 = vmatmul.mubr.f32.gmra.mrb[0].mxu0 %v650
        %v773 = vpop.f32.mrb[0].mxu0
        %v774 = vadd.f32 0.0, %v773
        %v775 = vpop.f32.mrb[0].mxu0
        %776 = vmatprep.mubr.f32.mxu0 0.0
        %777 = vmatmul.mubr.f32.gmra.mrb[0].mxu0 %v653
        %v778 = vpop.f32.mrb[0].mxu0
        %v779 = vadd.f32 0.0, %v778
        %v780 = vpop.f32.mrb[0].mxu0
        %781 = vmatprep.mubr.f32.mxu0 0.0
        %782 = vmatmul.mubr.f32.gmra.mrb[0].mxu0 %v656
        %v783 = vpop.f32.mrb[0].mxu0
        %v784 = vadd.f32 0.0, %v783
        %v785 = vpop.f32.mrb[0].mxu0
        %786 = vmatprep.mubr.f32.mxu0 0.0
        %787 = vmatmul.mubr.f32.gmra.mrb[0].mxu0 %v659
        %v788 = vpop.f32.mrb[0].mxu0
        %v789 = vadd.f32 0.0, %v788
        %v790 = vpop.f32.mrb[0].mxu0
        %791 = vmatprep.mubr.f32.mxu0 0.0
        %792 = vmatmul.mubr.f32.gmra.mrb[0].mxu0 %v662
        %v793 = vpop.f32.mrb[0].mxu0
        %v794 = vadd.f32 0.0, %v793
        %v795 = vpop.f32.mrb[0].mxu0
        %796 = vmatprep.mubr.f32.mxu0 0.0
        %797 = vmatmul.mubr.f32.gmra.mrb[0].mxu0 %v665
        %v798 = vpop.f32.mrb[0].mxu0
        %v799 = vadd.f32 0.0, %v798
        %v800 = vpop.f32.mrb[0].mxu0
        %801 = vmatprep.mubr.f32.mxu0 0.0
        %802 = vmatmul.mubr.f32.gmra.mrb[0].mxu0 %v668
        %v803 = vpop.f32.mrb[0].mxu0
        %v804 = vadd.f32 0.0, %v803
        %v805 = vpop.f32.mrb[0].mxu0
        %806 = vmatprep.mubr.f32.mxu0 0.0
        %807 = vmatmul.mubr.f32.gmra.mrb[0].mxu0 %v671
        %v808 = vpop.f32.mrb[0].mxu0
        %v809 = vadd.f32 0.0, %v808
        %v810 = vpop.f32.mrb[0].mxu0
        %811 = vmatprep.mubr.f32.mxu0 0.0
        %812 = vmatmul.mubr.f32.gmra.mrb[0].mxu0 %v674
        %v813 = vpop.f32.mrb[0].mxu0
        %v814 = vadd.f32 0.0, %v813
        %v815 = vpop.f32.mrb[0].mxu0
        %816 = vmatprep.mubr.f32.mxu0 0.0
        %817 = vmatmul.mubr.f32.gmra.mrb[0].mxu0 %v677
        %v818 = vpop.f32.mrb[0].mxu0
        %v819 = vadd.f32 0.0, %v818
        %v820 = vpop.f32.mrb[0].mxu0
        %821 = vmatprep.mubr.f32.mxu0 0.0
        %822 = vmatmul.mubr.f32.gmra.mrb[0].mxu0 %v680
        %v823 = vpop.f32.mrb[0].mxu0
        %v824 = vadd.f32 0.0, %v823
        %v825 = vpop.f32.mrb[0].mxu0
        %826 = vdwg.mxu0
        loop: start=0, step=1, limit=8
        $region37: #{feature_extractor.1} parent=35 // loop_pre_header
          _
        $region38: #{feature_extractor.1} parent=35 // loop_header
          %s828 = sphi 0, %s832
          %p829 = scmp.ge.s32.totalorder %s828, 8
          %v833 = vphi %v749, %v1050
          %v834 = vphi %v754, %v1051
          %v835 = vphi %v759, %v1052
          %v836 = vphi %v764, %v1053
          %v837 = vphi %v769, %v1054
          %v838 = vphi %v774, %v1055
          %v839 = vphi %v779, %v1056
          %v840 = vphi %v784, %v1057
          %v841 = vphi %v789, %v1058
          %v842 = vphi %v794, %v1059
          %v843 = vphi %v799, %v1060
          %v844 = vphi %v804, %v1061
          %v845 = vphi %v809, %v1062
          %v846 = vphi %v814, %v1063
          %v847 = vphi %v819, %v1064
          %v848 = vphi %v824, %v1065
          %v849 = vphi -inf, %v1042
          %v850 = vphi -inf, %v1043
          %v851 = vphi -inf, %v1044
          %v852 = vphi -inf, %v1045
          %v853 = vphi -inf, %v1046
          %v854 = vphi -inf, %v1047
          %v855 = vphi -inf, %v1048
          %v856 = vphi -inf, %v1049
        $region39: #{feature_extractor.1} parent=35 // loop_header_branch
          %831 = sbr.rel (%p829) target = $region43
        $region40: #{feature_extractor.1} parent=35 // loop_body
          %857 = vmin.xlane.f32.xlu0 %v833
          %v858 = vpop.xlane.xlu0 %857
          %859 = vmin.xlane.f32.xlu0 %v834
          %v860 = vpop.xlane.xlu0 %859
          %861 = vmin.xlane.f32.xlu0 %v835
          %v862 = vpop.xlane.xlu0 %861
          %863 = vmin.xlane.f32.xlu0 %v836
          %v864 = vpop.xlane.xlu0 %863
          %865 = vmin.xlane.f32.xlu0 %v837
          %v866 = vpop.xlane.xlu0 %865
          %867 = vmin.xlane.f32.xlu0 %v838
          %v868 = vpop.xlane.xlu0 %867
          %869 = vmin.xlane.f32.xlu0 %v839
          %v870 = vpop.xlane.xlu0 %869
          %871 = vmin.xlane.f32.xlu0 %v840
          %v872 = vpop.xlane.xlu0 %871
          %873 = vmin.xlane.f32.xlu0 %v841
          %v874 = vpop.xlane.xlu0 %873
          %875 = vmin.xlane.f32.xlu0 %v842
          %v876 = vpop.xlane.xlu0 %875
          %877 = vmin.xlane.f32.xlu0 %v843
          %v878 = vpop.xlane.xlu0 %877
          %879 = vmin.xlane.f32.xlu0 %v844
          %v880 = vpop.xlane.xlu0 %879
          %881 = vmin.xlane.f32.xlu0 %v845
          %v882 = vpop.xlane.xlu0 %881
          %883 = vmin.xlane.f32.xlu0 %v846
          %v884 = vpop.xlane.xlu0 %883
          %885 = vmin.xlane.f32.xlu0 %v847
          %v886 = vpop.xlane.xlu0 %885
          %887 = vmin.xlane.f32.xlu0 %v848
          %v888 = vpop.xlane.xlu0 %887
          %vm889 = vcmp.eq.f32.partialorder %v833, %v858
          %vm890 = vcmp.eq.f32.partialorder %v834, %v860
          %vm891 = vcmp.eq.f32.partialorder %v835, %v862
          %vm892 = vcmp.eq.f32.partialorder %v836, %v864
          %vm893 = vcmp.eq.f32.partialorder %v837, %v866
          %vm894 = vcmp.eq.f32.partialorder %v838, %v868
          %vm895 = vcmp.eq.f32.partialorder %v839, %v870
          %vm896 = vcmp.eq.f32.partialorder %v840, %v872
          %vm897 = vcmp.eq.f32.partialorder %v841, %v874
          %vm898 = vcmp.eq.f32.partialorder %v842, %v876
          %vm899 = vcmp.eq.f32.partialorder %v843, %v878
          %vm900 = vcmp.eq.f32.partialorder %v844, %v880
          %vm901 = vcmp.eq.f32.partialorder %v845, %v882
          %vm902 = vcmp.eq.f32.partialorder %v846, %v884
          %vm903 = vcmp.eq.f32.partialorder %v847, %v886
          %vm904 = vcmp.eq.f32.partialorder %v848, %v888
          %v905 = vsel %vm889, 1, 0
          %v906 = vsel %vm890, 1, 0
          %v907 = vsel %vm891, 1, 0
          %v908 = vsel %vm892, 1, 0
          %v909 = vsel %vm893, 1, 0
          %v910 = vsel %vm894, 1, 0
          %v911 = vsel %vm895, 1, 0
          %v912 = vsel %vm896, 1, 0
          %v913 = vsel %vm897, 1, 0
          %v914 = vsel %vm898, 1, 0
          %v915 = vsel %vm899, 1, 0
          %v916 = vsel %vm900, 1, 0
          %v917 = vsel %vm901, 1, 0
          %v918 = vsel %vm902, 1, 0
          %v919 = vsel %vm903, 1, 0
          %v920 = vsel %vm904, 1, 0
          %v921 = vcvt.s32.f32 %v905
          %v922 = vcvt.s32.f32 %v906
          %v923 = vcvt.s32.f32 %v907
          %v924 = vcvt.s32.f32 %v908
          %v925 = vcvt.s32.f32 %v909
          %v926 = vcvt.s32.f32 %v910
          %v927 = vcvt.s32.f32 %v911
          %v928 = vcvt.s32.f32 %v912
          %v929 = vcvt.s32.f32 %v913
          %v930 = vcvt.s32.f32 %v914
          %v931 = vcvt.s32.f32 %v915
          %v932 = vcvt.s32.f32 %v916
          %v933 = vcvt.s32.f32 %v917
          %v934 = vcvt.s32.f32 %v918
          %v935 = vcvt.s32.f32 %v919
          %v936 = vcvt.s32.f32 %v920
          %937 = vmatprep.subr.mxu0 0.0
          %938 = vmatpush1.xpose.msra.mxu0 %v921
          %939 = vmatprep.subr.mxu0 0.0
          %940 = vmatpush1.xpose.msra.mxu0 %v922
          %941 = vmatprep.subr.mxu0 0.0
          %942 = vmatpush1.xpose.msra.mxu0 %v923
          %943 = vmatprep.subr.mxu0 0.0
          %944 = vmatpush1.xpose.msra.mxu0 %v924
          %945 = vmatprep.subr.mxu0 0.0
          %946 = vmatpush1.xpose.msra.mxu0 %v925
          %947 = vmatprep.subr.mxu0 0.0
          %948 = vmatpush1.xpose.msra.mxu0 %v926
          %949 = vmatprep.subr.mxu0 0.0
          %950 = vmatpush1.xpose.msra.mxu0 %v927
          %951 = vmatprep.subr.mxu0 0.0
          %952 = vmatpush1.xpose.msra.mxu0 %v928
          %953 = vmatprep.subr.mxu0 0.0
          %954 = vmatpush1.xpose.msra.mxu0 %v929
          %955 = vmatprep.subr.mxu0 0.0
          %956 = vmatpush1.xpose.msra.mxu0 %v930
          %957 = vmatprep.subr.mxu0 0.0
          %958 = vmatpush1.xpose.msra.mxu0 %v931
          %959 = vmatprep.subr.mxu0 0.0
          %960 = vmatpush1.xpose.msra.mxu0 %v932
          %961 = vmatprep.subr.mxu0 0.0
          %962 = vmatpush1.xpose.msra.mxu0 %v933
          %963 = vmatprep.subr.mxu0 0.0
          %964 = vmatpush1.xpose.msra.mxu0 %v934
          %965 = vmatprep.subr.mxu0 0.0
          %966 = vmatpush1.xpose.msra.mxu0 %v935
          %967 = vmatprep.subr.mxu0 0.0
          %968 = vmatpush1.xpose.msra.mxu0 %v936
          %969 = vmatprep.subr.mxu0 0.0
          %970 = vmatpush1.xpose.msra.mxu0 0.0
          %971 = vmatprep.subr.mxu0 0.0
          %972 = vmatpush1.xpose.msra.mxu0 0.0
          %973 = vmatprep.subr.mxu0 0.0
          %974 = vmatpush1.xpose.msra.mxu0 0.0
          %975 = vmatprep.subr.mxu0 0.0
          %976 = vmatpush1.xpose.msra.mxu0 0.0
          %977 = vmatprep.subr.mxu0 0.0
          %978 = vmatpush1.xpose.msra.mxu0 0.0
          %979 = vmatprep.subr.mxu0 0.0
          %980 = vmatpush1.xpose.msra.mxu0 0.0
          %981 = vmatprep.subr.mxu0 0.0
          %982 = vmatpush1.xpose.msra.mxu0 0.0
          %983 = vmatprep.subr.mxu0 0.0
          %984 = vmatpush1.xpose.msra.mxu0 0.0
          %985 = vmatprep.subr.mxu0 0.0
          %986 = vmatpush1.xpose.msra.mxu0 0.0
          %987 = vmatprep.subr.mxu0 0.0
          %988 = vmatpush1.xpose.msra.mxu0 0.0
          %989 = vmatprep.subr.mxu0 0.0
          %990 = vmatpush1.xpose.msra.mxu0 0.0
          %991 = vmatprep.subr.mxu0 0.0
          %992 = vmatpush1.xpose.msra.mxu0 0.0
          %993 = vmatprep.subr.mxu0 0.0
          %994 = vmatpush1.xpose.msra.mxu0 0.0
          %995 = vmatprep.subr.mxu0 0.0
          %996 = vmatpush1.xpose.msra.mxu0 0.0
          %997 = vmatprep.subr.mxu0 0.0
          %998 = vmatpush1.xpose.msra.mxu0 0.0
          %999 = vmatprep.subr.mxu0 0.0
          %1000 = vmatpush1.xpose.msra.mxu0 0.0
          %1001 = vmatprep.mubr.f32.mxu0 0.0
          %1002 = vmatmul.mubr.f32.gmra.mrb[0].mxu0 %v547
          %v1003 = vpop.f32.mrb[0].mxu0
          %v1004 = vadd.f32 0.0, %v1003
          %v1005 = vpop.f32.mrb[0].mxu0
          %1006 = vmatprep.mubr.f32.mxu0 0.0
          %1007 = vmatmul.mubr.f32.gmra.mrb[0].mxu0 %v552
          %v1008 = vpop.f32.mrb[0].mxu0
          %v1009 = vadd.f32 0.0, %v1008
          %v1010 = vpop.f32.mrb[0].mxu0
          %1011 = vmatprep.mubr.f32.mxu0 0.0
          %1012 = vmatmul.mubr.f32.gmra.mrb[0].mxu0 %v557
          %v1013 = vpop.f32.mrb[0].mxu0
          %v1014 = vadd.f32 0.0, %v1013
          %v1015 = vpop.f32.mrb[0].mxu0
          %1016 = vmatprep.mubr.f32.mxu0 0.0
          %1017 = vmatmul.mubr.f32.gmra.mrb[0].mxu0 %v562
          %v1018 = vpop.f32.mrb[0].mxu0
          %v1019 = vadd.f32 0.0, %v1018
          %v1020 = vpop.f32.mrb[0].mxu0
          %1021 = vmatprep.mubr.f32.mxu0 0.0
          %1022 = vmatmul.mubr.f32.gmra.mrb[0].mxu0 %v567
          %v1023 = vpop.f32.mrb[0].mxu0
          %v1024 = vadd.f32 0.0, %v1023
          %v1025 = vpop.f32.mrb[0].mxu0
          %1026 = vmatprep.mubr.f32.mxu0 0.0
          %1027 = vmatmul.mubr.f32.gmra.mrb[0].mxu0 %v572
          %v1028 = vpop.f32.mrb[0].mxu0
          %v1029 = vadd.f32 0.0, %v1028
          %v1030 = vpop.f32.mrb[0].mxu0
          %1031 = vmatprep.mubr.f32.mxu0 0.0
          %1032 = vmatmul.mubr.f32.gmra.mrb[0].mxu0 %v577
          %v1033 = vpop.f32.mrb[0].mxu0
          %v1034 = vadd.f32 0.0, %v1033
          %v1035 = vpop.f32.mrb[0].mxu0
          %1036 = vmatprep.mubr.f32.mxu0 0.0
          %1037 = vmatmul.mubr.f32.gmra.mrb[0].mxu0 %v582
          %v1038 = vpop.f32.mrb[0].mxu0
          %v1039 = vadd.f32 0.0, %v1038
          %v1040 = vpop.f32.mrb[0].mxu0
          %1041 = vdwg.mxu0
          %v1042 = vmax.f32 %v849, %v1004
          %v1043 = vmax.f32 %v850, %v1009
          %v1044 = vmax.f32 %v851, %v1014
          %v1045 = vmax.f32 %v852, %v1019
          %v1046 = vmax.f32 %v853, %v1024
          %v1047 = vmax.f32 %v854, %v1029
          %v1048 = vmax.f32 %v855, %v1034
          %v1049 = vmax.f32 %v856, %v1039
          %v1050 = vsel %vm889, 3e+38, %v833
          %v1051 = vsel %vm890, 3e+38, %v834
          %v1052 = vsel %vm891, 3e+38, %v835
          %v1053 = vsel %vm892, 3e+38, %v836
          %v1054 = vsel %vm893, 3e+38, %v837
          %v1055 = vsel %vm894, 3e+38, %v838
          %v1056 = vsel %vm895, 3e+38, %v839
          %v1057 = vsel %vm896, 3e+38, %v840
          %v1058 = vsel %vm897, 3e+38, %v841
          %v1059 = vsel %vm898, 3e+38, %v842
          %v1060 = vsel %vm899, 3e+38, %v843
          %v1061 = vsel %vm900, 3e+38, %v844
          %v1062 = vsel %vm901, 3e+38, %v845
          %v1063 = vsel %vm902, 3e+38, %v846
          %v1064 = vsel %vm903, 3e+38, %v847
          %v1065 = vsel %vm904, 3e+38, %v848
        $region41: #{feature_extractor.1} parent=35 // loop_footer
          %s832 = sadd.s32 1, %s828
        $region42: #{feature_extractor.1} parent=35 // loop_footer_branch
          %827 = sbr.rel target = $region38
        $region43: #{feature_extractor.1} parent=35 // loop_exit
          _
        %v1066 = vadd.f32 %v507, %v849
        %v1067 = vadd.f32 %v512, %v850
        %v1068 = vadd.f32 %v517, %v851
        %v1069 = vadd.f32 %v522, %v852
        %v1070 = vadd.f32 %v527, %v853
        %v1071 = vadd.f32 %v532, %v854
        %v1072 = vadd.f32 %v537, %v855
        %v1073 = vadd.f32 %v542, %v856
        %v1074 = vmax.f32 %v1066, 0.0
        %v1075 = vmax.f32 %v1067, 0.0
        %v1076 = vmax.f32 %v1068, 0.0
        %v1077 = vmax.f32 %v1069, 0.0
        %v1078 = vmax.f32 %v1070, 0.0
        %v1079 = vmax.f32 %v1071, 0.0
        %v1080 = vmax.f32 %v1072, 0.0
        %v1081 = vmax.f32 %v1073, 0.0
        %1082 = vst [vmem:[%s216 + $0x80] sm:$0xff] %v1074
        %1083 = vst [vmem:[%s216 + $0x88] sm:$0xff] %v1075
        %1084 = vst [vmem:[%s216 + $0x90] sm:$0xff] %v1076
        %1085 = vst [vmem:[%s216 + $0x98] sm:$0xff] %v1077
        %1086 = vst [vmem:[%s216 + $0xa0] sm:$0xff] %v1078
        %1087 = vst [vmem:[%s216 + $0xa8] sm:$0xff] %v1079
        %1088 = vst [vmem:[%s216 + $0xb0] sm:$0xff] %v1080
        %1089 = vst [vmem:[%s216 + $0xb8] sm:$0xff] %v1081
        %s1090 = sand.u32 %s125, 1
        %s1091 = scalar_lea.sflag [#allocation3], %s1090
        %s1092 = sand.u32 %s125, 1
        %s1093 = smul.addr %s1092, 192
        %s1094 = scalar_lea.vmem [#allocation2], %s1093
        // Predicated region
        $region44: #{feature_extractor.1} parent=35 // pred_check
          %p1095 = pneg %p135
        $region45: #{feature_extractor.1} parent=35 // pred_check_branch
          %1097 = sbr.rel (%p1095) target = $region47
        $region46: #{feature_extractor.1} parent=35 // pred_region
          %s1099 = ssub.s32 3072, 3072
          %1100 = vsyncadd %s1091, %s1099
          %s1101 = smul.addr %s18, 24
          %s1102 = smul.addr %s1101, 128
          %s1103 = scalar_lea.hbm %s4, %s1102
          %s1104 = sshll.u32 %s1094, 4
          %s1105 = int_to_ptr.vmem [resolvable:$true] %s1104
          %1110 = dma.vmem_to_hbm [thread:$0]  %s1105, 3072, %s1103, %s1091, 128, 128, 8
        $region47: #{feature_extractor.1} parent=35 // pred_fallthru
          _
      $region36: #{feature_extractor.1} parent=5 // pred_fallthru
        _
      %p1111 = scmp.le.s32.totalorder 2, %s13
      // Predicated region
      $region48: #{feature_extractor.1} parent=5 // pred_check
        %p1112 = pneg %p1111
      $region49: #{feature_extractor.1} parent=5 // pred_check_branch
        %1114 = sbr.rel (%p1112) target = $region51
      $region50: #{feature_extractor.1} parent=5 // pred_region
        %s1115 = ssub.s32 %s13, 2
        // Predicated region
        $region52: #{feature_extractor.1} parent=50 // pred_check
          %p1116 = pneg %p141
        $region53: #{feature_extractor.1} parent=50 // pred_check_branch
          %1118 = sbr.rel (%p1116) target = $region55
        $region54: #{feature_extractor.1} parent=50 // pred_region
          %s1119 = sand.u32 %s126, 1
          %s1120 = scalar_lea.sflag [#allocation3], %s1119
          %s1121 = sand.u32 %s126, 1
          %s1122 = smul.addr %s1121, 192
          %s1123 = scalar_lea.vmem [#allocation2], %s1122
          %1124 = dma.done %s1120, 3072
        $region55: #{feature_extractor.1} parent=50 // pred_fallthru
          _
      $region51: #{feature_extractor.1} parent=5 // pred_fallthru
        _
    $region6: #{feature_extractor.1} parent=1 // loop_footer
      %s17 = sadd.s32 1, %s13
    $region7: #{feature_extractor.1} parent=1 // loop_footer_branch
      %12 = sbr.rel target = $region3
    $region8: #{feature_extractor.1} parent=1 // loop_exit
      _
    %1125 = vsyncpa [#allocation3], 1
    %s1126 = scalar_lea.sflag [#allocation3], 1
    %1127 = vsyncpa %s1126, 1

</llo_original>
